<compile_context>
chip_gen: v7x
topology: tpu7x:2x2x1
jax: 0.10.0
libtpu: 0.0.40
codegen_flags: <defaults>
</compile_context>

<pallas_src>
import jax
import jax.numpy as jnp
from jax import lax
from jax.experimental import pallas as pl
from jax.experimental.pallas import tpu as pltpu

EPS = 1e-5  # PyTorch InstanceNorm1d default eps (affine=False, biased variance)


def cnn_block_kernel(x_ref, w1_ref, b1_ref, w2_ref, b2_ref, seg_ref, segt_ref,
                     out_ref):
    # x_ref:    (C_in,  BN*L)   flat block: BN batch elements along the lane axis
    # w1_ref:   (C_out, 2*C_in)   conv1 taps stacked on the contraction axis
    # w2_ref:   (C_out, 2*C_out)  conv2 taps stacked on the contraction axis
    # b1_ref/b2_ref: (C_out, 1)
    # seg_ref:  (BN*L, BN)  segment-sum matrix      S[j, b]  = 1 if j // L == b
    # segt_ref: (BN, BN*L)  segment-broadcast matrix S^T
    # out_ref:  (C_out, BN*L)
    c_in, nl = x_ref.shape
    c_out = out_ref.shape[0]
    bn = seg_ref.shape[1]
    seq_len = nl // bn
    rep = c_out // c_in
    inv_l = 1.0 / seq_len

    seg = seg_ref[...]
    segt = segt_ref[...]

    # Mask marking the first lane of every L-segment (hoisted, reused twice).
    lane = lax.broadcasted_iota(jnp.int32, (1, nl), 1)
    first_col = (lane % seq_len) == 0

    def inorm(v):
        # Per-(channel, batch-segment) instance norm over the L lanes of each
        # segment.  One-pass stats via MXU segment-sum matmuls (no reshapes).
        mean = jnp.dot(v, seg, preferred_element_type=jnp.float32) * inv_l       # (C, BN)
        ex2 = jnp.dot(v * v, seg, preferred_element_type=jnp.float32) * inv_l    # (C, BN)
        var = jnp.maximum(ex2 - mean * mean, 0.0)
        rstd = lax.rsqrt(var + EPS)                                              # (C, BN)
        scale_b = jnp.dot(rstd, segt, preferred_element_type=jnp.float32)        # (C, BN*L)
        shift_b = jnp.dot(mean * rstd, segt, preferred_element_type=jnp.float32) # (C, BN*L)
        return v * scale_b - shift_b

    def shift_right(v):
        # Causal shift by one within each L-lane segment (zero fill at the
        # segment start).  XLU lane-roll + mask: no cross-batch leakage.
        rolled = pltpu.roll(v, shift=1, axis=1)
        return jnp.where(first_col, 0.0, rolled)

    x = x_ref[...].astype(jnp.float32)                        # (C_in, BN*L)

    # normalization1 + left_zero_padding + conv1 + ReLU
    xn = inorm(x)
    x2 = jnp.concatenate([shift_right(xn), xn], axis=0)       # (2*C_in, BN*L)
    h = jnp.dot(w1_ref[...], x2, preferred_element_type=jnp.float32) + b1_ref[...]
    h = jnp.maximum(h, 0.0)                                   # (C_out, BN*L)

    # normalization2 + left_zero_padding + conv2 + ReLU
    hn = inorm(h)
    h2 = jnp.concatenate([shift_right(hn), hn], axis=0)       # (2*C_out, BN*L)
    o = jnp.dot(w2_ref[...], h2, preferred_element_type=jnp.float32) + b2_ref[...]
    o = jnp.maximum(o, 0.0)                                   # (C_out, BN*L)

    # residual with the *normalized* x, tiled along channels; one lane-dense store.
    res = o + jnp.concatenate([xn] * rep, axis=0)
    out_ref[...] = res.astype(out_ref.dtype)


def _tpu_vmem_capacity_bytes():
    try:
        return int(pltpu.get_tpu_info().vmem_capacity_bytes)
    except Exception:
        return 64 << 20  # conservative fallback (v7x per-core physical VMEM)


def _choose_block_n(n, c_in, c_out, seq_len, itemsize=4, max_bn=64):
    """Pick the batch-fold factor BN (divides N).

    Constraints: per-step footprint (double-buffered in/out blocks + segment
    matrices + in-flight intermediates) stays well under a generation-aware
    VMEM budget; lane block stays 128-aligned when the grid has >1 step.
    Preference: fat blocks with an EVEN number of grid steps (balances v7x's
    two TensorCores); otherwise the largest fitting divisor (single-step is
    fine on single-TC v5e/v6e and for tiny batches)."""
    budget = _tpu_vmem_capacity_bytes() // 4

    def fits(bn):
        steps = n // bn
        if steps > 1 and (bn * seq_len) % 128 != 0:
            return False
        io = 2 * bn * seq_len * (c_in + c_out) * itemsize       # double-buffered blocks
        segm = 2 * bn * bn * seq_len * itemsize                 # segment matrices
        live = 8 * bn * seq_len * c_out * itemsize              # intermediates (fudge)
        return io + segm + live <= budget

    divs = [d for d in range(1, min(n, max_bn) + 1) if n % d == 0 and fits(d)]
    if not divs:
        return 1
    even = [d for d in divs if d >= 8 and (n // d) % 2 == 0]
    return max(even) if even else max(divs)


@jax.jit
def cnn_block_forward(x, w1, b1, w2, b2):
    # x: (N, C_in, L); w1: (C_out, C_in, 2); b1: (C_out,)
    # w2: (C_out, C_out, 2); b2: (C_out,)
    N, C_in, L = x.shape
    C_out = w1.shape[0]
    assert C_out % C_in == 0, "residual repeat needs out_filters % in_filters == 0"

    # --- host-side layout plumbing (cheap XLA ops, outside the kernel) ---
    # Fold the batch into the lane axis: (N, C, L) -> (C, N*L).
    x_flat = jnp.transpose(x, (1, 0, 2)).reshape(C_in, N * L)

    # Conv taps stacked along the contraction axis:
    #   conv(x)[t] = W[:,:,0] @ x[t-1] + W[:,:,1] @ x[t]  ->  W' @ [shift(x); x]
    w1s = jnp.concatenate([w1[:, :, 0], w1[:, :, 1]], axis=1).astype(jnp.float32)  # (C_out, 2*C_in)
    w2s = jnp.concatenate([w2[:, :, 0], w2[:, :, 1]], axis=1).astype(jnp.float32)  # (C_out, 2*C_out)
    b1c = b1.reshape(C_out, 1).astype(jnp.float32)
    b2c = b2.reshape(C_out, 1).astype(jnp.float32)

    BN = _choose_block_n(N, C_in, C_out, L)
    NL = BN * L
    grid = (N // BN,)

    # Constant segment-sum / segment-broadcast matrices for the folded layout.
    seg = (jnp.arange(NL)[:, None] // L == jnp.arange(BN)[None, :]).astype(jnp.float32)  # (NL, BN)
    segt = seg.T                                                                          # (BN, NL)

    const2 = lambda shape: pl.BlockSpec(shape, lambda n: (0, 0))

    out_flat = pl.pallas_call(
        cnn_block_kernel,
        out_shape=jax.ShapeDtypeStruct((C_out, N * L), x.dtype),
        grid_spec=pltpu.PrefetchScalarGridSpec(
            num_scalar_prefetch=0,
            grid=grid,
            in_specs=[
                pl.BlockSpec((C_in, NL), lambda n: (0, n)),   # x block (BN batches on lanes)
                const2((C_out, 2 * C_in)),                    # conv1 taps
                const2((C_out, 1)),                           # b1
                const2((C_out, 2 * C_out)),                   # conv2 taps
                const2((C_out, 1)),                           # b2
                const2((NL, BN)),                             # segment-sum matrix
                const2((BN, NL)),                             # segment-broadcast matrix
            ],
            out_specs=pl.BlockSpec((C_out, NL), lambda n: (0, n)),
        ),
        compiler_params=pltpu.CompilerParams(
            dimension_semantics=("parallel",),
            vmem_limit_bytes=min(_tpu_vmem_capacity_bytes() // 2, 96 << 20),
        ),
    )(x_flat, w1s, b1c, w2s, b2c, seg, segt)

    # (C_out, N*L) -> (N, C_out, L)
    return out_flat.reshape(C_out, N, L).transpose(1, 0, 2)


def reference_forward(x, w1, b1, w2, b2):
    # Pure-JAX reference matching the PyTorch module semantics.
    def inorm(v):
        m = v.mean(axis=-1, keepdims=True)
        var = ((v - m) ** 2).mean(axis=-1, keepdims=True)
        return (v - m) / jnp.sqrt(var + EPS)

    def causal_conv(v, w, b):
        k = w.shape[-1]
        vp = jnp.pad(v, ((0, 0), (0, 0), (k - 1, 0)))
        out = lax.conv_general_dilated(
            vp, w, window_strides=(1,), padding="VALID",
            dimension_numbers=("NCH", "OIH", "NCH"))
        return out + b[None, :, None]

    xn = inorm(x)
    h = jax.nn.relu(causal_conv(xn, w1, b1))
    hn = inorm(h)
    o = jax.nn.relu(causal_conv(hn, w2, b2))
    rep = w2.shape[0] // x.shape[1]
    return o + jnp.tile(xn, (1, rep, 1))


if __name__ == "__main__":
    # Module config: in_filters=4, out_filters=8, filter_size=2, normalization=True
    N, C_in, C_out, L, K = 2, 4, 8, 128, 2

    key = jax.random.PRNGKey(0)
    kx, k1, k2, k3, k4 = jax.random.split(key, 5)

    x = jax.random.normal(kx, (N, C_in, L), dtype=jnp.float32)
    # Deterministic synthetic parameters (nn.Conv1d shapes: (out, in, kernel))
    w1 = jax.random.normal(k1, (C_out, C_in, K), dtype=jnp.float32) * 0.2
    b1 = jax.random.normal(k2, (C_out,), dtype=jnp.float32) * 0.1
    w2 = jax.random.normal(k3, (C_out, C_out, K), dtype=jnp.float32) * 0.2
    b2 = jax.random.normal(k4, (C_out,), dtype=jnp.float32) * 0.1

    out = cnn_block_forward(x, w1, b1, w2, b2)
    jax.block_until_ready(out)

    ref = reference_forward(x, w1, b1, w2, b2)
    assert out.shape == (N, C_out, L)
    assert jnp.allclose(out, ref, atol=2e-4, rtol=2e-4), "mismatch vs reference"

    print("KERNEL_OK")
</pallas_src>

<mosaic_0001>
module attributes {stable_mosaic.version = 11 : i64} {
  func.func @cnn_block_kernel(%arg0: i32, %arg1: memref<4x256xf32, #tpu.memory_space<vmem>>, %arg2: memref<8x8xf32, #tpu.memory_space<vmem>>, %arg3: memref<8x1xf32, #tpu.memory_space<vmem>>, %arg4: memref<8x16xf32, #tpu.memory_space<vmem>>, %arg5: memref<8x1xf32, #tpu.memory_space<vmem>>, %arg6: memref<256x2xf32, #tpu.memory_space<vmem>>, %arg7: memref<2x256xf32, #tpu.memory_space<vmem>>, %arg8: memref<8x256xf32, #tpu.memory_space<vmem>>) attributes {dimension_semantics = [#tpu.dimension_semantics<parallel>], iteration_bounds = array<i64: 1>, scalar_prefetch = 0 : i64, scratch_operands = 0 : i64, tpu.core_type = #tpu.core_type<tc>, window_params = [{transform_indices = @transform_0, window_bounds = array<i64: 4, 256>}, {pipeline_mode = #tpu.pipeline_mode<synchronous>, transform_indices = @transform_1, window_bounds = array<i64: 8, 8>}, {pipeline_mode = #tpu.pipeline_mode<synchronous>, transform_indices = @transform_2, window_bounds = array<i64: 8, 1>}, {pipeline_mode = #tpu.pipeline_mode<synchronous>, transform_indices = @transform_3, window_bounds = array<i64: 8, 16>}, {pipeline_mode = #tpu.pipeline_mode<synchronous>, transform_indices = @transform_4, window_bounds = array<i64: 8, 1>}, {pipeline_mode = #tpu.pipeline_mode<synchronous>, transform_indices = @transform_5, window_bounds = array<i64: 256, 2>}, {pipeline_mode = #tpu.pipeline_mode<synchronous>, transform_indices = @transform_6, window_bounds = array<i64: 2, 256>}, {transform_indices = @transform_7, window_bounds = array<i64: 8, 256>}]} {
    %c0 = arith.constant 0 : index
    %c0_0 = arith.constant 0 : index
    %0 = vector.load %arg6[%c0, %c0_0] : memref<256x2xf32, #tpu.memory_space<vmem>>, vector<256x2xf32>
    %c0_1 = arith.constant 0 : index
    %c0_2 = arith.constant 0 : index
    %1 = vector.load %arg7[%c0_1, %c0_2] : memref<2x256xf32, #tpu.memory_space<vmem>>, vector<2x256xf32>
    %2 = tpu.iota {dimensions = array<i32: 1>} : vector<1x256xi32>
    %c128_i32 = arith.constant 128 : i32
    %c0_i32 = arith.constant 0 : i32
    %3 = arith.cmpi eq, %c128_i32, %c0_i32 : i32
    %c1_i32 = arith.constant 1 : i32
    %4 = arith.select %3, %c1_i32, %c128_i32 : i32
    %5 = vector.broadcast %4 : i32 to vector<1x256xi32>
    %6 = arith.remsi %2, %5 : vector<1x256xi32>
    %c0_i32_3 = arith.constant 0 : i32
    %7 = vector.broadcast %c0_i32_3 : i32 to vector<1x256xi32>
    %8 = arith.cmpi ne, %6, %7 : vector<1x256xi32>
    %c0_i32_4 = arith.constant 0 : i32
    %9 = vector.broadcast %c0_i32_4 : i32 to vector<1x256xi32>
    %10 = arith.cmpi slt, %6, %9 : vector<1x256xi32>
    %c0_i32_5 = arith.constant 0 : i32
    %11 = arith.cmpi slt, %4, %c0_i32_5 : i32
    %12 = vector.broadcast %11 : i1 to vector<1x256xi1>
    %13 = vector.broadcast %12 : vector<1x256xi1> to vector<1x256xi1>
    %14 = arith.xori %10, %13 : vector<1x256xi1>
    %15 = arith.andi %14, %8 : vector<1x256xi1>
    %16 = vector.broadcast %4 : i32 to vector<1x256xi32>
    %17 = arith.addi %6, %16 : vector<1x256xi32>
    %18 = arith.select %15, %17, %6 : vector<1x256xi1>, vector<1x256xi32>
    %c0_i32_6 = arith.constant 0 : i32
    %19 = vector.broadcast %c0_i32_6 : i32 to vector<1x256xi32>
    %20 = arith.cmpi eq, %18, %19 : vector<1x256xi32>
    %c0_7 = arith.constant 0 : index
    %c0_8 = arith.constant 0 : index
    %21 = vector.load %arg1[%c0_7, %c0_8] : memref<4x256xf32, #tpu.memory_space<vmem>>, vector<4x256xf32>
    %cst = arith.constant dense<0.000000e+00> : vector<4x2xf32>
    %22 = tpu.matmul %21, %0, %cst {dimension_numbers = #tpu.dot_dimension_numbers<[1], [0], [0], [1], [0, 0, 1, 1], [], []>} : vector<4x256xf32>, vector<256x2xf32>, vector<4x2xf32> -> vector<4x2xf32>
    %cst_9 = arith.constant 7.812500e-03 : f32
    %23 = vector.broadcast %cst_9 : f32 to vector<4x2xf32>
    %24 = arith.mulf %22, %23 : vector<4x2xf32>
    %25 = arith.mulf %21, %21 : vector<4x256xf32>
    %cst_10 = arith.constant dense<0.000000e+00> : vector<4x2xf32>
    %26 = tpu.matmul %25, %0, %cst_10 {dimension_numbers = #tpu.dot_dimension_numbers<[1], [0], [0], [1], [0, 0, 1, 1], [], []>} : vector<4x256xf32>, vector<256x2xf32>, vector<4x2xf32> -> vector<4x2xf32>
    %cst_11 = arith.constant 7.812500e-03 : f32
    %27 = vector.broadcast %cst_11 : f32 to vector<4x2xf32>
    %28 = arith.mulf %26, %27 : vector<4x2xf32>
    %29 = arith.mulf %24, %24 : vector<4x2xf32>
    %30 = arith.subf %28, %29 : vector<4x2xf32>
    %cst_12 = arith.constant 0.000000e+00 : f32
    %31 = vector.broadcast %cst_12 : f32 to vector<4x2xf32>
    %32 = arith.maximumf %30, %31 : vector<4x2xf32>
    %cst_13 = arith.constant 9.99999974E-6 : f32
    %33 = vector.broadcast %cst_13 : f32 to vector<4x2xf32>
    %34 = arith.addf %32, %33 : vector<4x2xf32>
    %35 = math.rsqrt %34 : vector<4x2xf32>
    %cst_14 = arith.constant dense<0.000000e+00> : vector<4x256xf32>
    %36 = tpu.matmul %35, %1, %cst_14 {dimension_numbers = #tpu.dot_dimension_numbers<[1], [0], [0], [1], [0, 0, 1, 1], [], []>} : vector<4x2xf32>, vector<2x256xf32>, vector<4x256xf32> -> vector<4x256xf32>
    %37 = arith.mulf %24, %35 : vector<4x2xf32>
    %cst_15 = arith.constant dense<0.000000e+00> : vector<4x256xf32>
    %38 = tpu.matmul %37, %1, %cst_15 {dimension_numbers = #tpu.dot_dimension_numbers<[1], [0], [0], [1], [0, 0, 1, 1], [], []>} : vector<4x2xf32>, vector<2x256xf32>, vector<4x256xf32> -> vector<4x256xf32>
    %39 = arith.mulf %21, %36 : vector<4x256xf32>
    %40 = arith.subf %39, %38 : vector<4x256xf32>
    %c1_i32_16 = arith.constant 1 : i32
    %41 = tpu.dynamic_rotate %40 by %c1_i32_16 dim 1 : vector<4x256xf32>, i32 -> vector<4x256xf32>
    %cst_17 = arith.constant 0.000000e+00 : f32
    %42 = vector.shape_cast %20 : vector<1x256xi1> to vector<1x256xi1>
    %43 = vector.broadcast %42 : vector<1x256xi1> to vector<4x256xi1>
    %44 = vector.broadcast %cst_17 : f32 to vector<4x256xf32>
    %45 = arith.select %43, %44, %41 : vector<4x256xi1>, vector<4x256xf32>
    %46 = tpu.concatenate %45, %40 in 0 : vector<4x256xf32>, vector<4x256xf32> -> vector<8x256xf32>
    %c0_18 = arith.constant 0 : index
    %c0_19 = arith.constant 0 : index
    %47 = vector.load %arg2[%c0_18, %c0_19] : memref<8x8xf32, #tpu.memory_space<vmem>>, vector<8x8xf32>
    %cst_20 = arith.constant dense<0.000000e+00> : vector<8x256xf32>
    %48 = tpu.matmul %47, %46, %cst_20 {dimension_numbers = #tpu.dot_dimension_numbers<[1], [0], [0], [1], [0, 0, 1, 1], [], []>} : vector<8x8xf32>, vector<8x256xf32>, vector<8x256xf32> -> vector<8x256xf32>
    %c0_21 = arith.constant 0 : index
    %c0_22 = arith.constant 0 : index
    %49 = vector.load %arg3[%c0_21, %c0_22] : memref<8x1xf32, #tpu.memory_space<vmem>>, vector<8x1xf32>
    %50 = vector.broadcast %49 : vector<8x1xf32> to vector<8x256xf32>
    %51 = arith.addf %48, %50 : vector<8x256xf32>
    %cst_23 = arith.constant 0.000000e+00 : f32
    %52 = vector.broadcast %cst_23 : f32 to vector<8x256xf32>
    %53 = arith.maximumf %51, %52 : vector<8x256xf32>
    %cst_24 = arith.constant dense<0.000000e+00> : vector<8x2xf32>
    %54 = tpu.matmul %53, %0, %cst_24 {dimension_numbers = #tpu.dot_dimension_numbers<[1], [0], [0], [1], [0, 0, 1, 1], [], []>} : vector<8x256xf32>, vector<256x2xf32>, vector<8x2xf32> -> vector<8x2xf32>
    %cst_25 = arith.constant 7.812500e-03 : f32
    %55 = vector.broadcast %cst_25 : f32 to vector<8x2xf32>
    %56 = arith.mulf %54, %55 : vector<8x2xf32>
    %57 = arith.mulf %53, %53 : vector<8x256xf32>
    %cst_26 = arith.constant dense<0.000000e+00> : vector<8x2xf32>
    %58 = tpu.matmul %57, %0, %cst_26 {dimension_numbers = #tpu.dot_dimension_numbers<[1], [0], [0], [1], [0, 0, 1, 1], [], []>} : vector<8x256xf32>, vector<256x2xf32>, vector<8x2xf32> -> vector<8x2xf32>
    %cst_27 = arith.constant 7.812500e-03 : f32
    %59 = vector.broadcast %cst_27 : f32 to vector<8x2xf32>
    %60 = arith.mulf %58, %59 : vector<8x2xf32>
    %61 = arith.mulf %56, %56 : vector<8x2xf32>
    %62 = arith.subf %60, %61 : vector<8x2xf32>
    %cst_28 = arith.constant 0.000000e+00 : f32
    %63 = vector.broadcast %cst_28 : f32 to vector<8x2xf32>
    %64 = arith.maximumf %62, %63 : vector<8x2xf32>
    %cst_29 = arith.constant 9.99999974E-6 : f32
    %65 = vector.broadcast %cst_29 : f32 to vector<8x2xf32>
    %66 = arith.addf %64, %65 : vector<8x2xf32>
    %67 = math.rsqrt %66 : vector<8x2xf32>
    %cst_30 = arith.constant dense<0.000000e+00> : vector<8x256xf32>
    %68 = tpu.matmul %67, %1, %cst_30 {dimension_numbers = #tpu.dot_dimension_numbers<[1], [0], [0], [1], [0, 0, 1, 1], [], []>} : vector<8x2xf32>, vector<2x256xf32>, vector<8x256xf32> -> vector<8x256xf32>
    %69 = arith.mulf %56, %67 : vector<8x2xf32>
    %cst_31 = arith.constant dense<0.000000e+00> : vector<8x256xf32>
    %70 = tpu.matmul %69, %1, %cst_31 {dimension_numbers = #tpu.dot_dimension_numbers<[1], [0], [0], [1], [0, 0, 1, 1], [], []>} : vector<8x2xf32>, vector<2x256xf32>, vector<8x256xf32> -> vector<8x256xf32>
    %71 = arith.mulf %53, %68 : vector<8x256xf32>
    %72 = arith.subf %71, %70 : vector<8x256xf32>
    %c1_i32_32 = arith.constant 1 : i32
    %73 = tpu.dynamic_rotate %72 by %c1_i32_32 dim 1 : vector<8x256xf32>, i32 -> vector<8x256xf32>
    %cst_33 = arith.constant 0.000000e+00 : f32
    %74 = vector.shape_cast %20 : vector<1x256xi1> to vector<1x256xi1>
    %75 = vector.broadcast %74 : vector<1x256xi1> to vector<8x256xi1>
    %76 = vector.broadcast %cst_33 : f32 to vector<8x256xf32>
    %77 = arith.select %75, %76, %73 : vector<8x256xi1>, vector<8x256xf32>
    %78 = tpu.concatenate %77, %72 in 0 : vector<8x256xf32>, vector<8x256xf32> -> vector<16x256xf32>
    %c0_34 = arith.constant 0 : index
    %c0_35 = arith.constant 0 : index
    %79 = vector.load %arg4[%c0_34, %c0_35] : memref<8x16xf32, #tpu.memory_space<vmem>>, vector<8x16xf32>
    %cst_36 = arith.constant dense<0.000000e+00> : vector<8x256xf32>
    %80 = tpu.matmul %79, %78, %cst_36 {dimension_numbers = #tpu.dot_dimension_numbers<[1], [0], [0], [1], [0, 0, 1, 1], [], []>} : vector<8x16xf32>, vector<16x256xf32>, vector<8x256xf32> -> vector<8x256xf32>
    %c0_37 = arith.constant 0 : index
    %c0_38 = arith.constant 0 : index
    %81 = vector.load %arg5[%c0_37, %c0_38] : memref<8x1xf32, #tpu.memory_space<vmem>>, vector<8x1xf32>
    %82 = vector.broadcast %81 : vector<8x1xf32> to vector<8x256xf32>
    %83 = arith.addf %80, %82 : vector<8x256xf32>
    %cst_39 = arith.constant 0.000000e+00 : f32
    %84 = vector.broadcast %cst_39 : f32 to vector<8x256xf32>
    %85 = arith.maximumf %83, %84 : vector<8x256xf32>
    %86 = tpu.concatenate %40, %40 in 0 : vector<4x256xf32>, vector<4x256xf32> -> vector<8x256xf32>
    %87 = arith.addf %85, %86 : vector<8x256xf32>
    %c0_40 = arith.constant 0 : index
    %c0_41 = arith.constant 0 : index
    %88 = vector.load %arg8[%c0_40, %c0_41] : memref<8x256xf32, #tpu.memory_space<vmem>>, vector<8x256xf32>
    tpu.vector_store %arg8[%c0_40, %c0_41], %87 {strides = array<i32>} : memref<8x256xf32, #tpu.memory_space<vmem>>, vector<8x256xf32>,
    return
  }
  func.func @transform_0(%arg0: i32) -> (i32, i32) {
    %c0_i32 = arith.constant 0 : i32
    %c0_i32_0 = arith.constant 0 : i32
    return %c0_i32, %arg0 : i32, i32
  }
  func.func @transform_1(%arg0: i32) -> (i32, i32) {
    %c0_i32 = arith.constant 0 : i32
    %c0_i32_0 = arith.constant 0 : i32
    %c0_i32_1 = arith.constant 0 : i32
    return %c0_i32, %c0_i32_0 : i32, i32
  }
  func.func @transform_2(%arg0: i32) -> (i32, i32) {
    %c0_i32 = arith.constant 0 : i32
    %c0_i32_0 = arith.constant 0 : i32
    %c0_i32_1 = arith.constant 0 : i32
    return %c0_i32, %c0_i32_0 : i32, i32
  }
  func.func @transform_3(%arg0: i32) -> (i32, i32) {
    %c0_i32 = arith.constant 0 : i32
    %c0_i32_0 = arith.constant 0 : i32
    %c0_i32_1 = arith.constant 0 : i32
    return %c0_i32, %c0_i32_0 : i32, i32
  }
  func.func @transform_4(%arg0: i32) -> (i32, i32) {
    %c0_i32 = arith.constant 0 : i32
    %c0_i32_0 = arith.constant 0 : i32
    %c0_i32_1 = arith.constant 0 : i32
    return %c0_i32, %c0_i32_0 : i32, i32
  }
  func.func @transform_5(%arg0: i32) -> (i32, i32) {
    %c0_i32 = arith.constant 0 : i32
    %c0_i32_0 = arith.constant 0 : i32
    %c0_i32_1 = arith.constant 0 : i32
    return %c0_i32, %c0_i32_0 : i32, i32
  }
  func.func @transform_6(%arg0: i32) -> (i32, i32) {
    %c0_i32 = arith.constant 0 : i32
    %c0_i32_0 = arith.constant 0 : i32
    %c0_i32_1 = arith.constant 0 : i32
    return %c0_i32, %c0_i32_0 : i32, i32
  }
  func.func @transform_7(%arg0: i32) -> (i32, i32) {
    %c0_i32 = arith.constant 0 : i32
    %c0_i32_0 = arith.constant 0 : i32
    return %c0_i32, %arg0 : i32, i32
  }
}

</mosaic_0001>

<llo_original>
// kernel: cnn_block_forward.1
$region0: #{cnn_block_forward.1}
  #allocation0 [shape = 'u32[]', space=smem, size = 0x4, offset = 0x4, fixed_abs, tag = 'smem constant byte address 0x4 - core index']
  #allocation1 [shape = 'u32[144,128]{1,0:T(1,128)}', space=vmem, size = 0x12000, scoped, tag = 'internal scratch']
  %s0 = inlined_call_operand.vmem [shape: f32[4,256], index: 0, kind: input, shape index: {}]
  %s1 = inlined_call_operand.vmem [shape: f32[8,8], index: 1, kind: input, shape index: {}]
  %s2 = inlined_call_operand.vmem [shape: f32[8,1], index: 2, kind: input, shape index: {}]
  %s3 = inlined_call_operand.vmem [shape: f32[8,16], index: 3, kind: input, shape index: {}]
  %s4 = inlined_call_operand.vmem [shape: f32[8,1], index: 4, kind: input, shape index: {}]
  %s5 = inlined_call_operand.vmem [shape: f32[256,2], index: 5, kind: input, shape index: {}]
  %s6 = inlined_call_operand.vmem [shape: f32[2,256], index: 6, kind: input, shape index: {}]
  %s7 = inlined_call_operand.hbm [shape: f32[8,256], index: 7, kind: output, shape index: {}]
  %s8 = sld [smem:[#allocation0]]
  $region38: #{cnn_block_forward.1} parent=0
    _
  %s10 = ssub.s32 1, %s8
  %s11 = scalar_select 0, %s10, %s8
  $region1: #{cnn_block_forward.1} parent=0
    #allocation2 [shape = 'u8[8192]{0}', space=vmem, size = 0x2000, scoped, tag = 'output window, operand 0, single buffered']
    #allocation3 [shape = 's32[1]{0}', space=sflag, size = 0x4, scoped, tag = 'scoped memory for cnn_block_forward.1']
    %12 = vsyncpa [#allocation3], 0
    // Predicated region
    $region2: #{cnn_block_forward.1} parent=1 // pred_check
      _
    $region3: #{cnn_block_forward.1} parent=1 // pred_check_branch
      %14 = sbr.rel (0) target = $region5
    $region4: #{cnn_block_forward.1} parent=1 // pred_region
      _
    $region5: #{cnn_block_forward.1} parent=1 // pred_fallthru
      _
    // Predicated region
    $region6: #{cnn_block_forward.1} parent=1 // pred_check
      _
    $region7: #{cnn_block_forward.1} parent=1 // pred_check_branch
      %16 = sbr.rel (0) target = $region9
    $region8: #{cnn_block_forward.1} parent=1 // pred_region
      _
    $region9: #{cnn_block_forward.1} parent=1 // pred_fallthru
      _
    // Predicated region
    $region10: #{cnn_block_forward.1} parent=1 // pred_check
      _
    $region11: #{cnn_block_forward.1} parent=1 // pred_check_branch
      %18 = sbr.rel (0) target = $region13
    $region12: #{cnn_block_forward.1} parent=1 // pred_region
      _
    $region13: #{cnn_block_forward.1} parent=1 // pred_fallthru
      _
    // Predicated region
    $region14: #{cnn_block_forward.1} parent=1 // pred_check
      _
    $region15: #{cnn_block_forward.1} parent=1 // pred_check_branch
      %20 = sbr.rel (0) target = $region17
    $region16: #{cnn_block_forward.1} parent=1 // pred_region
      _
    $region17: #{cnn_block_forward.1} parent=1 // pred_fallthru
      _
    // Predicated region
    $region18: #{cnn_block_forward.1} parent=1 // pred_check
      _
    $region19: #{cnn_block_forward.1} parent=1 // pred_check_branch
      %22 = sbr.rel (0) target = $region21
    $region20: #{cnn_block_forward.1} parent=1 // pred_region
      _
    $region21: #{cnn_block_forward.1} parent=1 // pred_fallthru
      _
    // Predicated region
    $region22: #{cnn_block_forward.1} parent=1 // pred_check
      _
    $region23: #{cnn_block_forward.1} parent=1 // pred_check_branch
      %24 = sbr.rel (0) target = $region25
    $region24: #{cnn_block_forward.1} parent=1 // pred_region
      _
    $region25: #{cnn_block_forward.1} parent=1 // pred_fallthru
      _
    // Predicated region
    $region26: #{cnn_block_forward.1} parent=1 // pred_check
      _
    $region27: #{cnn_block_forward.1} parent=1 // pred_check_branch
      %26 = sbr.rel (0) target = $region29
    $region28: #{cnn_block_forward.1} parent=1 // pred_region
      _
    $region29: #{cnn_block_forward.1} parent=1 // pred_fallthru
      _
    %v27 = vld [vmem:[%s5] sm:$0xff]
    %v28 = vld [vmem:[%s5 + $0x8] sm:$0xff]
    %v29 = vld [vmem:[%s5 + $0x10] sm:$0xff]
    %v30 = vld [vmem:[%s5 + $0x18] sm:$0xff]
    %v31 = vld [vmem:[%s5 + $0x20] sm:$0xff]
    %v32 = vld [vmem:[%s5 + $0x28] sm:$0xff]
    %v33 = vld [vmem:[%s5 + $0x30] sm:$0xff]
    %v34 = vld [vmem:[%s5 + $0x38] sm:$0xff]
    %v35 = vld [vmem:[%s5 + $0x40] sm:$0xff]
    %v36 = vld [vmem:[%s5 + $0x48] sm:$0xff]
    %v37 = vld [vmem:[%s5 + $0x50] sm:$0xff]
    %v38 = vld [vmem:[%s5 + $0x58] sm:$0xff]
    %v39 = vld [vmem:[%s5 + $0x60] sm:$0xff]
    %v40 = vld [vmem:[%s5 + $0x68] sm:$0xff]
    %v41 = vld [vmem:[%s5 + $0x70] sm:$0xff]
    %v42 = vld [vmem:[%s5 + $0x78] sm:$0xff]
    %v43 = vld [vmem:[%s5 + $0x80] sm:$0xff]
    %v44 = vld [vmem:[%s5 + $0x88] sm:$0xff]
    %v45 = vld [vmem:[%s5 + $0x90] sm:$0xff]
    %v46 = vld [vmem:[%s5 + $0x98] sm:$0xff]
    %v47 = vld [vmem:[%s5 + $0xa0] sm:$0xff]
    %v48 = vld [vmem:[%s5 + $0xa8] sm:$0xff]
    %v49 = vld [vmem:[%s5 + $0xb0] sm:$0xff]
    %v50 = vld [vmem:[%s5 + $0xb8] sm:$0xff]
    %v51 = vld [vmem:[%s5 + $0xc0] sm:$0xff]
    %v52 = vld [vmem:[%s5 + $0xc8] sm:$0xff]
    %v53 = vld [vmem:[%s5 + $0xd0] sm:$0xff]
    %v54 = vld [vmem:[%s5 + $0xd8] sm:$0xff]
    %v55 = vld [vmem:[%s5 + $0xe0] sm:$0xff]
    %v56 = vld [vmem:[%s5 + $0xe8] sm:$0xff]
    %v57 = vld [vmem:[%s5 + $0xf0] sm:$0xff]
    %v58 = vld [vmem:[%s5 + $0xf8] sm:$0xff]
    %v59 = vld [vmem:[%s6] sm:$0xf]
    %v60 = vlaneseq
    %v61 = vand.u32 %v60, 127
    %v62 = vadd.s32 %v61, 128
    %vm63 = vcmp.lt.s32.totalorder %v61, 0
    %v64 = vsub.s32 0, %v61
    %v65 = vsel %vm63, %v64, %v61
    %v66 = vshrl.u32 %v65, 7
    %v67 = vand.u32 %v65, 127
    %v68 = vsub.s32 0, %v67
    %v69 = vsel %vm63, %v68, %v67
    %vm70 = vcmp.lt.s32.totalorder %v62, 0
    %v71 = vsub.s32 0, %v62
    %v72 = vsel %vm70, %v71, %v62
    %v73 = vshrl.u32 %v72, 7
    %v74 = vand.u32 %v72, 127
    %v75 = vsub.s32 0, %v74
    %v76 = vsel %vm70, %v75, %v74
    %vm77 = vcmp.ne.s32.totalorder %v69, 0
    %vm78 = vcmp.ne.s32.totalorder %v76, 0
    %vm79 = vcmp.lt.s32.totalorder %v69, 0
    %vm80 = vcmp.lt.s32.totalorder %v76, 0
    %vm81 = vmand %vm79, %vm77
    %vm82 = vmand %vm80, %vm78
    %v83 = vadd.s32 %v69, 128
    %v84 = vadd.s32 %v76, 128
    %v85 = vsel %vm81, %v83, %v69
    %v86 = vsel %vm82, %v84, %v76
    %vm87 = vcmp.eq.s32.totalorder %v85, 0
    %vm88 = vcmp.eq.s32.totalorder %v86, 0
    %v89 = vld [vmem:[%s0] sm:$0xff]
    %v91 = vcombine.high %v89, %v89
    %93 = vmatprep.subr.mxu0 0.0
    %94 = vmatpush1.msra.mxu0 %v27
    %95 = vmatprep.subr.mxu0 0.0
    %96 = vmatpush1.msra.mxu0 %v28
    %97 = vmatprep.subr.mxu0 0.0
    %98 = vmatpush1.msra.mxu0 %v29
    %99 = vmatprep.subr.mxu0 0.0
    %100 = vmatpush1.msra.mxu0 %v30
    %101 = vmatprep.subr.mxu0 0.0
    %102 = vmatpush1.msra.mxu0 %v31
    %103 = vmatprep.subr.mxu0 0.0
    %104 = vmatpush1.msra.mxu0 %v32
    %105 = vmatprep.subr.mxu0 0.0
    %106 = vmatpush1.msra.mxu0 %v33
    %107 = vmatprep.subr.mxu0 0.0
    %108 = vmatpush1.msra.mxu0 %v34
    %109 = vmatprep.subr.mxu0 0.0
    %110 = vmatpush1.msra.mxu0 %v35
    %111 = vmatprep.subr.mxu0 0.0
    %112 = vmatpush1.msra.mxu0 %v36
    %113 = vmatprep.subr.mxu0 0.0
    %114 = vmatpush1.msra.mxu0 %v37
    %115 = vmatprep.subr.mxu0 0.0
    %116 = vmatpush1.msra.mxu0 %v38
    %117 = vmatprep.subr.mxu0 0.0
    %118 = vmatpush1.msra.mxu0 %v39
    %119 = vmatprep.subr.mxu0 0.0
    %120 = vmatpush1.msra.mxu0 %v40
    %121 = vmatprep.subr.mxu0 0.0
    %122 = vmatpush1.msra.mxu0 %v41
    %123 = vmatprep.subr.mxu0 0.0
    %124 = vmatpush1.msra.mxu0 %v42
    %125 = vmatprep.subr.mxu0 0.0
    %126 = vmatpush1.msra.mxu0 %v43
    %127 = vmatprep.subr.mxu0 0.0
    %128 = vmatpush1.msra.mxu0 %v44
    %129 = vmatprep.subr.mxu0 0.0
    %130 = vmatpush1.msra.mxu0 %v45
    %131 = vmatprep.subr.mxu0 0.0
    %132 = vmatpush1.msra.mxu0 %v46
    %133 = vmatprep.subr.mxu0 0.0
    %134 = vmatpush1.msra.mxu0 %v47
    %135 = vmatprep.subr.mxu0 0.0
    %136 = vmatpush1.msra.mxu0 %v48
    %137 = vmatprep.subr.mxu0 0.0
    %138 = vmatpush1.msra.mxu0 %v49
    %139 = vmatprep.subr.mxu0 0.0
    %140 = vmatpush1.msra.mxu0 %v50
    %141 = vmatprep.subr.mxu0 0.0
    %142 = vmatpush1.msra.mxu0 %v51
    %143 = vmatprep.subr.mxu0 0.0
    %144 = vmatpush1.msra.mxu0 %v52
    %145 = vmatprep.subr.mxu0 0.0
    %146 = vmatpush1.msra.mxu0 %v53
    %147 = vmatprep.subr.mxu0 0.0
    %148 = vmatpush1.msra.mxu0 %v54
    %149 = vmatprep.subr.mxu0 0.0
    %150 = vmatpush1.msra.mxu0 %v55
    %151 = vmatprep.subr.mxu0 0.0
    %152 = vmatpush1.msra.mxu0 %v56
    %153 = vmatprep.subr.mxu0 0.0
    %154 = vmatpush1.msra.mxu0 %v57
    %155 = vmatprep.subr.mxu0 0.0
    %156 = vmatpush1.msra.mxu0 %v58
    %157 = vmatprep.mubr.f32.mxu0 %v91
    %158 = vmatmul.mubr.f32.gmra.mrb[0].mxu0 %v89
    %v159 = vpop.f32.mrb[0].mxu0
    %v160 = vadd.f32 0.0, %v159
    %v161 = vpop.f32.mrb[0].mxu0
    %162 = vdwg.mxu0
    %v163 = vmul.f32 %v160, 0.0078125
    %v164 = vmul.f32 %v89, %v89
    %v166 = vcombine.high %v164, %v164
    %168 = vmatprep.subr.mxu0 0.0
    %169 = vmatpush1.msra.mxu0 %v27
    %170 = vmatprep.subr.mxu0 0.0
    %171 = vmatpush1.msra.mxu0 %v28
    %172 = vmatprep.subr.mxu0 0.0
    %173 = vmatpush1.msra.mxu0 %v29
    %174 = vmatprep.subr.mxu0 0.0
    %175 = vmatpush1.msra.mxu0 %v30
    %176 = vmatprep.subr.mxu0 0.0
    %177 = vmatpush1.msra.mxu0 %v31
    %178 = vmatprep.subr.mxu0 0.0
    %179 = vmatpush1.msra.mxu0 %v32
    %180 = vmatprep.subr.mxu0 0.0
    %181 = vmatpush1.msra.mxu0 %v33
    %182 = vmatprep.subr.mxu0 0.0
    %183 = vmatpush1.msra.mxu0 %v34
    %184 = vmatprep.subr.mxu0 0.0
    %185 = vmatpush1.msra.mxu0 %v35
    %186 = vmatprep.subr.mxu0 0.0
    %187 = vmatpush1.msra.mxu0 %v36
    %188 = vmatprep.subr.mxu0 0.0
    %189 = vmatpush1.msra.mxu0 %v37
    %190 = vmatprep.subr.mxu0 0.0
    %191 = vmatpush1.msra.mxu0 %v38
    %192 = vmatprep.subr.mxu0 0.0
    %193 = vmatpush1.msra.mxu0 %v39
    %194 = vmatprep.subr.mxu0 0.0
    %195 = vmatpush1.msra.mxu0 %v40
    %196 = vmatprep.subr.mxu0 0.0
    %197 = vmatpush1.msra.mxu0 %v41
    %198 = vmatprep.subr.mxu0 0.0
    %199 = vmatpush1.msra.mxu0 %v42
    %200 = vmatprep.subr.mxu0 0.0
    %201 = vmatpush1.msra.mxu0 %v43
    %202 = vmatprep.subr.mxu0 0.0
    %203 = vmatpush1.msra.mxu0 %v44
    %204 = vmatprep.subr.mxu0 0.0
    %205 = vmatpush1.msra.mxu0 %v45
    %206 = vmatprep.subr.mxu0 0.0
    %207 = vmatpush1.msra.mxu0 %v46
    %208 = vmatprep.subr.mxu0 0.0
    %209 = vmatpush1.msra.mxu0 %v47
    %210 = vmatprep.subr.mxu0 0.0
    %211 = vmatpush1.msra.mxu0 %v48
    %212 = vmatprep.subr.mxu0 0.0
    %213 = vmatpush1.msra.mxu0 %v49
    %214 = vmatprep.subr.mxu0 0.0
    %215 = vmatpush1.msra.mxu0 %v50
    %216 = vmatprep.subr.mxu0 0.0
    %217 = vmatpush1.msra.mxu0 %v51
    %218 = vmatprep.subr.mxu0 0.0
    %219 = vmatpush1.msra.mxu0 %v52
    %220 = vmatprep.subr.mxu0 0.0
    %221 = vmatpush1.msra.mxu0 %v53
    %222 = vmatprep.subr.mxu0 0.0
    %223 = vmatpush1.msra.mxu0 %v54
    %224 = vmatprep.subr.mxu0 0.0
    %225 = vmatpush1.msra.mxu0 %v55
    %226 = vmatprep.subr.mxu0 0.0
    %227 = vmatpush1.msra.mxu0 %v56
    %228 = vmatprep.subr.mxu0 0.0
    %229 = vmatpush1.msra.mxu0 %v57
    %230 = vmatprep.subr.mxu0 0.0
    %231 = vmatpush1.msra.mxu0 %v58
    %232 = vmatprep.mubr.f32.mxu0 %v166
    %233 = vmatmul.mubr.f32.gmra.mrb[0].mxu0 %v164
    %v234 = vpop.f32.mrb[0].mxu0
    %v235 = vadd.f32 0.0, %v234
    %v236 = vpop.f32.mrb[0].mxu0
    %237 = vdwg.mxu0
    %v238 = vmul.f32 %v235, 0.0078125
    %v239 = vmul.f32 %v163, %v163
    %v240 = vsub.f32 %v238, %v239
    %v241 = vmax.f32 %v240, 0.0
    %v242 = vadd.f32 %v241, 1e-05
    %v243 = vrsqrt.pop %v242
    %v246 = vunpack.c.l.s4 1983009808
    %v247 = vunpack.c.0.s8 %v246
    %v248 = vlaneseq
    %v249 = vshrl.u32 %v248, 7
    %v250 = vsub.s32 %v247, %v249
    %v251 = vrot.slane %v59, %v250
    %v252 = vcombine.high %v251, %v251
    %vm253 = vcmask 15360
    %v255 = vsel %vm253, %v243, 0
    %vm257 = vcmask 1041408
    %v258 = vsel %vm257, %v251, 0
    %v260 = vsel %vm257, %v252, 0
    %262 = vmatprep.subr.mxu0 %v260
    %263 = vmatpush1.msra.mxu0 %v258
    %264 = vmatprep.subr.mxu0 0.0
    %265 = vmatpush1.msra.mxu0 0.0
    %266 = vmatprep.subr.mxu0 0.0
    %267 = vmatpush1.msra.mxu0 0.0
    %268 = vmatprep.subr.mxu0 0.0
    %269 = vmatpush1.msra.mxu0 0.0
    %270 = vmatprep.subr.mxu0 0.0
    %271 = vmatpush1.msra.mxu0 0.0
    %272 = vmatprep.subr.mxu0 0.0
    %273 = vmatpush1.msra.mxu0 0.0
    %274 = vmatprep.subr.mxu0 0.0
    %275 = vmatpush1.msra.mxu0 0.0
    %276 = vmatprep.subr.mxu0 0.0
    %277 = vmatpush1.msra.mxu0 0.0
    %278 = vmatprep.subr.mxu0 0.0
    %279 = vmatpush1.msra.mxu0 0.0
    %280 = vmatprep.subr.mxu0 0.0
    %281 = vmatpush1.msra.mxu0 0.0
    %282 = vmatprep.subr.mxu0 0.0
    %283 = vmatpush1.msra.mxu0 0.0
    %284 = vmatprep.subr.mxu0 0.0
    %285 = vmatpush1.msra.mxu0 0.0
    %286 = vmatprep.subr.mxu0 0.0
    %287 = vmatpush1.msra.mxu0 0.0
    %288 = vmatprep.subr.mxu0 0.0
    %289 = vmatpush1.msra.mxu0 0.0
    %290 = vmatprep.subr.mxu0 0.0
    %291 = vmatpush1.msra.mxu0 0.0
    %292 = vmatprep.subr.mxu0 0.0
    %293 = vmatpush1.msra.mxu0 0.0
    %294 = vmatprep.subr.mxu0 0.0
    %295 = vmatpush1.msra.mxu0 0.0
    %296 = vmatprep.subr.mxu0 0.0
    %297 = vmatpush1.msra.mxu0 0.0
    %298 = vmatprep.subr.mxu0 0.0
    %299 = vmatpush1.msra.mxu0 0.0
    %300 = vmatprep.subr.mxu0 0.0
    %301 = vmatpush1.msra.mxu0 0.0
    %302 = vmatprep.subr.mxu0 0.0
    %303 = vmatpush1.msra.mxu0 0.0
    %304 = vmatprep.subr.mxu0 0.0
    %305 = vmatpush1.msra.mxu0 0.0
    %306 = vmatprep.subr.mxu0 0.0
    %307 = vmatpush1.msra.mxu0 0.0
    %308 = vmatprep.subr.mxu0 0.0
    %309 = vmatpush1.msra.mxu0 0.0
    %310 = vmatprep.subr.mxu0 0.0
    %311 = vmatpush1.msra.mxu0 0.0
    %312 = vmatprep.subr.mxu0 0.0
    %313 = vmatpush1.msra.mxu0 0.0
    %314 = vmatprep.subr.mxu0 0.0
    %315 = vmatpush1.msra.mxu0 0.0
    %316 = vmatprep.subr.mxu0 0.0
    %317 = vmatpush1.msra.mxu0 0.0
    %318 = vmatprep.subr.mxu0 0.0
    %319 = vmatpush1.msra.mxu0 0.0
    %320 = vmatprep.subr.mxu0 0.0
    %321 = vmatpush1.msra.mxu0 0.0
    %322 = vmatprep.subr.mxu0 0.0
    %323 = vmatpush1.msra.mxu0 0.0
    %324 = vmatprep.subr.mxu0 0.0
    %325 = vmatpush1.msra.mxu0 0.0
    %326 = vmatprep.mubr.f32.mxu0 0.0
    %327 = vmatmul.mubr.f32.gmra.mrb[0].mxu0 %v255
    %v328 = vpop.f32.mrb[0].mxu0
    %v329 = vadd.f32 0.0, %v328
    %v330 = vpop.f32.mrb[0].mxu0
    %v331 = vadd.f32 0.0, %v330
    %332 = vdwg.mxu0
    %v333 = vmul.f32 %v163, %v243
    %v335 = vsel %vm253, %v333, 0
    %337 = vmatprep.subr.mxu0 %v260
    %338 = vmatpush1.msra.mxu0 %v258
    %339 = vmatprep.subr.mxu0 0.0
    %340 = vmatpush1.msra.mxu0 0.0
    %341 = vmatprep.subr.mxu0 0.0
    %342 = vmatpush1.msra.mxu0 0.0
    %343 = vmatprep.subr.mxu0 0.0
    %344 = vmatpush1.msra.mxu0 0.0
    %345 = vmatprep.subr.mxu0 0.0
    %346 = vmatpush1.msra.mxu0 0.0
    %347 = vmatprep.subr.mxu0 0.0
    %348 = vmatpush1.msra.mxu0 0.0
    %349 = vmatprep.subr.mxu0 0.0
    %350 = vmatpush1.msra.mxu0 0.0
    %351 = vmatprep.subr.mxu0 0.0
    %352 = vmatpush1.msra.mxu0 0.0
    %353 = vmatprep.subr.mxu0 0.0
    %354 = vmatpush1.msra.mxu0 0.0
    %355 = vmatprep.subr.mxu0 0.0
    %356 = vmatpush1.msra.mxu0 0.0
    %357 = vmatprep.subr.mxu0 0.0
    %358 = vmatpush1.msra.mxu0 0.0
    %359 = vmatprep.subr.mxu0 0.0
    %360 = vmatpush1.msra.mxu0 0.0
    %361 = vmatprep.subr.mxu0 0.0
    %362 = vmatpush1.msra.mxu0 0.0
    %363 = vmatprep.subr.mxu0 0.0
    %364 = vmatpush1.msra.mxu0 0.0
    %365 = vmatprep.subr.mxu0 0.0
    %366 = vmatpush1.msra.mxu0 0.0
    %367 = vmatprep.subr.mxu0 0.0
    %368 = vmatpush1.msra.mxu0 0.0
    %369 = vmatprep.subr.mxu0 0.0
    %370 = vmatpush1.msra.mxu0 0.0
    %371 = vmatprep.subr.mxu0 0.0
    %372 = vmatpush1.msra.mxu0 0.0
    %373 = vmatprep.subr.mxu0 0.0
    %374 = vmatpush1.msra.mxu0 0.0
    %375 = vmatprep.subr.mxu0 0.0
    %376 = vmatpush1.msra.mxu0 0.0
    %377 = vmatprep.subr.mxu0 0.0
    %378 = vmatpush1.msra.mxu0 0.0
    %379 = vmatprep.subr.mxu0 0.0
    %380 = vmatpush1.msra.mxu0 0.0
    %381 = vmatprep.subr.mxu0 0.0
    %382 = vmatpush1.msra.mxu0 0.0
    %383 = vmatprep.subr.mxu0 0.0
    %384 = vmatpush1.msra.mxu0 0.0
    %385 = vmatprep.subr.mxu0 0.0
    %386 = vmatpush1.msra.mxu0 0.0
    %387 = vmatprep.subr.mxu0 0.0
    %388 = vmatpush1.msra.mxu0 0.0
    %389 = vmatprep.subr.mxu0 0.0
    %390 = vmatpush1.msra.mxu0 0.0
    %391 = vmatprep.subr.mxu0 0.0
    %392 = vmatpush1.msra.mxu0 0.0
    %393 = vmatprep.subr.mxu0 0.0
    %394 = vmatpush1.msra.mxu0 0.0
    %395 = vmatprep.subr.mxu0 0.0
    %396 = vmatpush1.msra.mxu0 0.0
    %397 = vmatprep.subr.mxu0 0.0
    %398 = vmatpush1.msra.mxu0 0.0
    %399 = vmatprep.subr.mxu0 0.0
    %400 = vmatpush1.msra.mxu0 0.0
    %401 = vmatprep.mubr.f32.mxu0 0.0
    %402 = vmatmul.mubr.f32.gmra.mrb[0].mxu0 %v335
    %v403 = vpop.f32.mrb[0].mxu0
    %v404 = vadd.f32 0.0, %v403
    %v405 = vpop.f32.mrb[0].mxu0
    %v406 = vadd.f32 0.0, %v405
    %407 = vdwg.mxu0
    %v410 = vcombine.low %v329, %v331
    %v412 = vmul.f32 %v89, %v410
    %v415 = vcombine.low %v404, %v406
    %v417 = vsub.f32 %v412, %v415
    %v419 = vcombine.high %v417, %v417
    %421 = vrot.lane.b32.xlu0 %v417, 1
    %v422 = vpop.permute.xlu0 %421
    %423 = vrot.lane.b32.xlu0 %v419, 1
    %v424 = vpop.permute.xlu0 %423
    %vm425 = vcmp.lt.s32.totalorder %v61, 1
    %v426 = vsel %vm425, %v422, %v424
    %v427 = vsel %vm425, %v424, %v422
    %v428 = vsel %vm87, 1, 0
    %v429 = vsel %vm88, 1, 0
    %vm430 = vcmp.eq.s32.totalorder %v428, 1
    %vm431 = vcmp.eq.s32.totalorder %v429, 1
    %v432 = vsel %vm430, 0.0, %v427
    %v433 = vsel %vm431, 0.0, %v426
    %v434 = vcombine.low %v417, %v417
    %vm436 = vcmask 1043456
    %v437 = vsel %vm436, %v432, %v434
    %v438 = vsel %vm436, %v433, %v417
    %v439 = vld [vmem:[%s1] sm:$0xff]
    %v440 = vld [vmem:[%s2] sm:$0xff]
    %442 = vset.pattern.permute.xlu0 0
    %443 = vperm.xlu0 %442, %v440
    %v444 = vpop.permute.xlu0 %443
    %vm446 = vcmask 64512
    %v448 = vsel %vm446, %v439, 0
    %450 = vmatprep.subr.mxu0 %v438
    %451 = vmatpush1.msra.mxu0 %v437
    %452 = vmatprep.subr.mxu0 0.0
    %453 = vmatpush1.msra.mxu0 0.0
    %454 = vmatprep.subr.mxu0 0.0
    %455 = vmatpush1.msra.mxu0 0.0
    %456 = vmatprep.subr.mxu0 0.0
    %457 = vmatpush1.msra.mxu0 0.0
    %458 = vmatprep.subr.mxu0 0.0
    %459 = vmatpush1.msra.mxu0 0.0
    %460 = vmatprep.subr.mxu0 0.0
    %461 = vmatpush1.msra.mxu0 0.0
    %462 = vmatprep.subr.mxu0 0.0
    %463 = vmatpush1.msra.mxu0 0.0
    %464 = vmatprep.subr.mxu0 0.0
    %465 = vmatpush1.msra.mxu0 0.0
    %466 = vmatprep.subr.mxu0 0.0
    %467 = vmatpush1.msra.mxu0 0.0
    %468 = vmatprep.subr.mxu0 0.0
    %469 = vmatpush1.msra.mxu0 0.0
    %470 = vmatprep.subr.mxu0 0.0
    %471 = vmatpush1.msra.mxu0 0.0
    %472 = vmatprep.subr.mxu0 0.0
    %473 = vmatpush1.msra.mxu0 0.0
    %474 = vmatprep.subr.mxu0 0.0
    %475 = vmatpush1.msra.mxu0 0.0
    %476 = vmatprep.subr.mxu0 0.0
    %477 = vmatpush1.msra.mxu0 0.0
    %478 = vmatprep.subr.mxu0 0.0
    %479 = vmatpush1.msra.mxu0 0.0
    %480 = vmatprep.subr.mxu0 0.0
    %481 = vmatpush1.msra.mxu0 0.0
    %482 = vmatprep.subr.mxu0 0.0
    %483 = vmatpush1.msra.mxu0 0.0
    %484 = vmatprep.subr.mxu0 0.0
    %485 = vmatpush1.msra.mxu0 0.0
    %486 = vmatprep.subr.mxu0 0.0
    %487 = vmatpush1.msra.mxu0 0.0
    %488 = vmatprep.subr.mxu0 0.0
    %489 = vmatpush1.msra.mxu0 0.0
    %490 = vmatprep.subr.mxu0 0.0
    %491 = vmatpush1.msra.mxu0 0.0
    %492 = vmatprep.subr.mxu0 0.0
    %493 = vmatpush1.msra.mxu0 0.0
    %494 = vmatprep.subr.mxu0 0.0
    %495 = vmatpush1.msra.mxu0 0.0
    %496 = vmatprep.subr.mxu0 0.0
    %497 = vmatpush1.msra.mxu0 0.0
    %498 = vmatprep.subr.mxu0 0.0
    %499 = vmatpush1.msra.mxu0 0.0
    %500 = vmatprep.subr.mxu0 0.0
    %501 = vmatpush1.msra.mxu0 0.0
    %502 = vmatprep.subr.mxu0 0.0
    %503 = vmatpush1.msra.mxu0 0.0
    %504 = vmatprep.subr.mxu0 0.0
    %505 = vmatpush1.msra.mxu0 0.0
    %506 = vmatprep.subr.mxu0 0.0
    %507 = vmatpush1.msra.mxu0 0.0
    %508 = vmatprep.subr.mxu0 0.0
    %509 = vmatpush1.msra.mxu0 0.0
    %510 = vmatprep.subr.mxu0 0.0
    %511 = vmatpush1.msra.mxu0 0.0
    %512 = vmatprep.subr.mxu0 0.0
    %513 = vmatpush1.msra.mxu0 0.0
    %514 = vmatprep.mubr.f32.mxu0 0.0
    %515 = vmatmul.mubr.f32.gmra.mrb[0].mxu0 %v448
    %v516 = vpop.f32.mrb[0].mxu0
    %v517 = vadd.f32 %v444, %v516
    %v518 = vpop.f32.mrb[0].mxu0
    %v519 = vadd.f32 %v444, %v518
    %520 = vdwg.mxu0
    %v521 = vmax.f32 %v517, 0.0
    %v522 = vmax.f32 %v519, 0.0
    %523 = vmatprep.subr.mxu0 0.0
    %524 = vmatpush1.msra.mxu0 %v27
    %525 = vmatprep.subr.mxu0 0.0
    %526 = vmatpush1.msra.mxu0 %v28
    %527 = vmatprep.subr.mxu0 0.0
    %528 = vmatpush1.msra.mxu0 %v29
    %529 = vmatprep.subr.mxu0 0.0
    %530 = vmatpush1.msra.mxu0 %v30
    %531 = vmatprep.subr.mxu0 0.0
    %532 = vmatpush1.msra.mxu0 %v31
    %533 = vmatprep.subr.mxu0 0.0
    %534 = vmatpush1.msra.mxu0 %v32
    %535 = vmatprep.subr.mxu0 0.0
    %536 = vmatpush1.msra.mxu0 %v33
    %537 = vmatprep.subr.mxu0 0.0
    %538 = vmatpush1.msra.mxu0 %v34
    %539 = vmatprep.subr.mxu0 0.0
    %540 = vmatpush1.msra.mxu0 %v35
    %541 = vmatprep.subr.mxu0 0.0
    %542 = vmatpush1.msra.mxu0 %v36
    %543 = vmatprep.subr.mxu0 0.0
    %544 = vmatpush1.msra.mxu0 %v37
    %545 = vmatprep.subr.mxu0 0.0
    %546 = vmatpush1.msra.mxu0 %v38
    %547 = vmatprep.subr.mxu0 0.0
    %548 = vmatpush1.msra.mxu0 %v39
    %549 = vmatprep.subr.mxu0 0.0
    %550 = vmatpush1.msra.mxu0 %v40
    %551 = vmatprep.subr.mxu0 0.0
    %552 = vmatpush1.msra.mxu0 %v41
    %553 = vmatprep.subr.mxu0 0.0
    %554 = vmatpush1.msra.mxu0 %v42
    %555 = vmatprep.subr.mxu0 0.0
    %556 = vmatpush1.msra.mxu0 %v43
    %557 = vmatprep.subr.mxu0 0.0
    %558 = vmatpush1.msra.mxu0 %v44
    %559 = vmatprep.subr.mxu0 0.0
    %560 = vmatpush1.msra.mxu0 %v45
    %561 = vmatprep.subr.mxu0 0.0
    %562 = vmatpush1.msra.mxu0 %v46
    %563 = vmatprep.subr.mxu0 0.0
    %564 = vmatpush1.msra.mxu0 %v47
    %565 = vmatprep.subr.mxu0 0.0
    %566 = vmatpush1.msra.mxu0 %v48
    %567 = vmatprep.subr.mxu0 0.0
    %568 = vmatpush1.msra.mxu0 %v49
    %569 = vmatprep.subr.mxu0 0.0
    %570 = vmatpush1.msra.mxu0 %v50
    %571 = vmatprep.subr.mxu0 0.0
    %572 = vmatpush1.msra.mxu0 %v51
    %573 = vmatprep.subr.mxu0 0.0
    %574 = vmatpush1.msra.mxu0 %v52
    %575 = vmatprep.subr.mxu0 0.0
    %576 = vmatpush1.msra.mxu0 %v53
    %577 = vmatprep.subr.mxu0 0.0
    %578 = vmatpush1.msra.mxu0 %v54
    %579 = vmatprep.subr.mxu0 0.0
    %580 = vmatpush1.msra.mxu0 %v55
    %581 = vmatprep.subr.mxu0 0.0
    %582 = vmatpush1.msra.mxu0 %v56
    %583 = vmatprep.subr.mxu0 0.0
    %584 = vmatpush1.msra.mxu0 %v57
    %585 = vmatprep.subr.mxu0 0.0
    %586 = vmatpush1.msra.mxu0 %v58
    %587 = vmatprep.mubr.f32.mxu0 %v522
    %588 = vmatmul.mubr.f32.gmra.mrb[0].mxu0 %v521
    %v589 = vpop.f32.mrb[0].mxu0
    %v590 = vadd.f32 0.0, %v589
    %v591 = vpop.f32.mrb[0].mxu0
    %592 = vdwg.mxu0
    %v593 = vmul.f32 %v590, 0.0078125
    %v594 = vmul.f32 %v521, %v521
    %v595 = vmul.f32 %v522, %v522
    %596 = vmatprep.subr.mxu0 0.0
    %597 = vmatpush1.msra.mxu0 %v27
    %598 = vmatprep.subr.mxu0 0.0
    %599 = vmatpush1.msra.mxu0 %v28
    %600 = vmatprep.subr.mxu0 0.0
    %601 = vmatpush1.msra.mxu0 %v29
    %602 = vmatprep.subr.mxu0 0.0
    %603 = vmatpush1.msra.mxu0 %v30
    %604 = vmatprep.subr.mxu0 0.0
    %605 = vmatpush1.msra.mxu0 %v31
    %606 = vmatprep.subr.mxu0 0.0
    %607 = vmatpush1.msra.mxu0 %v32
    %608 = vmatprep.subr.mxu0 0.0
    %609 = vmatpush1.msra.mxu0 %v33
    %610 = vmatprep.subr.mxu0 0.0
    %611 = vmatpush1.msra.mxu0 %v34
    %612 = vmatprep.subr.mxu0 0.0
    %613 = vmatpush1.msra.mxu0 %v35
    %614 = vmatprep.subr.mxu0 0.0
    %615 = vmatpush1.msra.mxu0 %v36
    %616 = vmatprep.subr.mxu0 0.0
    %617 = vmatpush1.msra.mxu0 %v37
    %618 = vmatprep.subr.mxu0 0.0
    %619 = vmatpush1.msra.mxu0 %v38
    %620 = vmatprep.subr.mxu0 0.0
    %621 = vmatpush1.msra.mxu0 %v39
    %622 = vmatprep.subr.mxu0 0.0
    %623 = vmatpush1.msra.mxu0 %v40
    %624 = vmatprep.subr.mxu0 0.0
    %625 = vmatpush1.msra.mxu0 %v41
    %626 = vmatprep.subr.mxu0 0.0
    %627 = vmatpush1.msra.mxu0 %v42
    %628 = vmatprep.subr.mxu0 0.0
    %629 = vmatpush1.msra.mxu0 %v43
    %630 = vmatprep.subr.mxu0 0.0
    %631 = vmatpush1.msra.mxu0 %v44
    %632 = vmatprep.subr.mxu0 0.0
    %633 = vmatpush1.msra.mxu0 %v45
    %634 = vmatprep.subr.mxu0 0.0
    %635 = vmatpush1.msra.mxu0 %v46
    %636 = vmatprep.subr.mxu0 0.0
    %637 = vmatpush1.msra.mxu0 %v47
    %638 = vmatprep.subr.mxu0 0.0
    %639 = vmatpush1.msra.mxu0 %v48
    %640 = vmatprep.subr.mxu0 0.0
    %641 = vmatpush1.msra.mxu0 %v49
    %642 = vmatprep.subr.mxu0 0.0
    %643 = vmatpush1.msra.mxu0 %v50
    %644 = vmatprep.subr.mxu0 0.0
    %645 = vmatpush1.msra.mxu0 %v51
    %646 = vmatprep.subr.mxu0 0.0
    %647 = vmatpush1.msra.mxu0 %v52
    %648 = vmatprep.subr.mxu0 0.0
    %649 = vmatpush1.msra.mxu0 %v53
    %650 = vmatprep.subr.mxu0 0.0
    %651 = vmatpush1.msra.mxu0 %v54
    %652 = vmatprep.subr.mxu0 0.0
    %653 = vmatpush1.msra.mxu0 %v55
    %654 = vmatprep.subr.mxu0 0.0
    %655 = vmatpush1.msra.mxu0 %v56
    %656 = vmatprep.subr.mxu0 0.0
    %657 = vmatpush1.msra.mxu0 %v57
    %658 = vmatprep.subr.mxu0 0.0
    %659 = vmatpush1.msra.mxu0 %v58
    %660 = vmatprep.mubr.f32.mxu0 %v595
    %661 = vmatmul.mubr.f32.gmra.mrb[0].mxu0 %v594
    %v662 = vpop.f32.mrb[0].mxu0
    %v663 = vadd.f32 0.0, %v662
    %v664 = vpop.f32.mrb[0].mxu0
    %665 = vdwg.mxu0
    %v666 = vmul.f32 %v663, 0.0078125
    %v667 = vmul.f32 %v593, %v593
    %v668 = vsub.f32 %v666, %v667
    %v669 = vmax.f32 %v668, 0.0
    %v670 = vadd.f32 %v669, 1e-05
    %v671 = vrsqrt.pop %v670
    %v673 = vsel %vm253, %v671, 0
    %675 = vmatprep.subr.mxu0 %v260
    %676 = vmatpush1.msra.mxu0 %v258
    %677 = vmatprep.subr.mxu0 0.0
    %678 = vmatpush1.msra.mxu0 0.0
    %679 = vmatprep.subr.mxu0 0.0
    %680 = vmatpush1.msra.mxu0 0.0
    %681 = vmatprep.subr.mxu0 0.0
    %682 = vmatpush1.msra.mxu0 0.0
    %683 = vmatprep.subr.mxu0 0.0
    %684 = vmatpush1.msra.mxu0 0.0
    %685 = vmatprep.subr.mxu0 0.0
    %686 = vmatpush1.msra.mxu0 0.0
    %687 = vmatprep.subr.mxu0 0.0
    %688 = vmatpush1.msra.mxu0 0.0
    %689 = vmatprep.subr.mxu0 0.0
    %690 = vmatpush1.msra.mxu0 0.0
    %691 = vmatprep.subr.mxu0 0.0
    %692 = vmatpush1.msra.mxu0 0.0
    %693 = vmatprep.subr.mxu0 0.0
    %694 = vmatpush1.msra.mxu0 0.0
    %695 = vmatprep.subr.mxu0 0.0
    %696 = vmatpush1.msra.mxu0 0.0
    %697 = vmatprep.subr.mxu0 0.0
    %698 = vmatpush1.msra.mxu0 0.0
    %699 = vmatprep.subr.mxu0 0.0
    %700 = vmatpush1.msra.mxu0 0.0
    %701 = vmatprep.subr.mxu0 0.0
    %702 = vmatpush1.msra.mxu0 0.0
    %703 = vmatprep.subr.mxu0 0.0
    %704 = vmatpush1.msra.mxu0 0.0
    %705 = vmatprep.subr.mxu0 0.0
    %706 = vmatpush1.msra.mxu0 0.0
    %707 = vmatprep.subr.mxu0 0.0
    %708 = vmatpush1.msra.mxu0 0.0
    %709 = vmatprep.subr.mxu0 0.0
    %710 = vmatpush1.msra.mxu0 0.0
    %711 = vmatprep.subr.mxu0 0.0
    %712 = vmatpush1.msra.mxu0 0.0
    %713 = vmatprep.subr.mxu0 0.0
    %714 = vmatpush1.msra.mxu0 0.0
    %715 = vmatprep.subr.mxu0 0.0
    %716 = vmatpush1.msra.mxu0 0.0
    %717 = vmatprep.subr.mxu0 0.0
    %718 = vmatpush1.msra.mxu0 0.0
    %719 = vmatprep.subr.mxu0 0.0
    %720 = vmatpush1.msra.mxu0 0.0
    %721 = vmatprep.subr.mxu0 0.0
    %722 = vmatpush1.msra.mxu0 0.0
    %723 = vmatprep.subr.mxu0 0.0
    %724 = vmatpush1.msra.mxu0 0.0
    %725 = vmatprep.subr.mxu0 0.0
    %726 = vmatpush1.msra.mxu0 0.0
    %727 = vmatprep.subr.mxu0 0.0
    %728 = vmatpush1.msra.mxu0 0.0
    %729 = vmatprep.subr.mxu0 0.0
    %730 = vmatpush1.msra.mxu0 0.0
    %731 = vmatprep.subr.mxu0 0.0
    %732 = vmatpush1.msra.mxu0 0.0
    %733 = vmatprep.subr.mxu0 0.0
    %734 = vmatpush1.msra.mxu0 0.0
    %735 = vmatprep.subr.mxu0 0.0
    %736 = vmatpush1.msra.mxu0 0.0
    %737 = vmatprep.subr.mxu0 0.0
    %738 = vmatpush1.msra.mxu0 0.0
    %739 = vmatprep.mubr.f32.mxu0 0.0
    %740 = vmatmul.mubr.f32.gmra.mrb[0].mxu0 %v673
    %v741 = vpop.f32.mrb[0].mxu0
    %v742 = vadd.f32 0.0, %v741
    %v743 = vpop.f32.mrb[0].mxu0
    %v744 = vadd.f32 0.0, %v743
    %745 = vdwg.mxu0
    %v746 = vmul.f32 %v593, %v671
    %v748 = vsel %vm253, %v746, 0
    %750 = vmatprep.subr.mxu0 %v260
    %751 = vmatpush1.msra.mxu0 %v258
    %752 = vmatprep.subr.mxu0 0.0
    %753 = vmatpush1.msra.mxu0 0.0
    %754 = vmatprep.subr.mxu0 0.0
    %755 = vmatpush1.msra.mxu0 0.0
    %756 = vmatprep.subr.mxu0 0.0
    %757 = vmatpush1.msra.mxu0 0.0
    %758 = vmatprep.subr.mxu0 0.0
    %759 = vmatpush1.msra.mxu0 0.0
    %760 = vmatprep.subr.mxu0 0.0
    %761 = vmatpush1.msra.mxu0 0.0
    %762 = vmatprep.subr.mxu0 0.0
    %763 = vmatpush1.msra.mxu0 0.0
    %764 = vmatprep.subr.mxu0 0.0
    %765 = vmatpush1.msra.mxu0 0.0
    %766 = vmatprep.subr.mxu0 0.0
    %767 = vmatpush1.msra.mxu0 0.0
    %768 = vmatprep.subr.mxu0 0.0
    %769 = vmatpush1.msra.mxu0 0.0
    %770 = vmatprep.subr.mxu0 0.0
    %771 = vmatpush1.msra.mxu0 0.0
    %772 = vmatprep.subr.mxu0 0.0
    %773 = vmatpush1.msra.mxu0 0.0
    %774 = vmatprep.subr.mxu0 0.0
    %775 = vmatpush1.msra.mxu0 0.0
    %776 = vmatprep.subr.mxu0 0.0
    %777 = vmatpush1.msra.mxu0 0.0
    %778 = vmatprep.subr.mxu0 0.0
    %779 = vmatpush1.msra.mxu0 0.0
    %780 = vmatprep.subr.mxu0 0.0
    %781 = vmatpush1.msra.mxu0 0.0
    %782 = vmatprep.subr.mxu0 0.0
    %783 = vmatpush1.msra.mxu0 0.0
    %784 = vmatprep.subr.mxu0 0.0
    %785 = vmatpush1.msra.mxu0 0.0
    %786 = vmatprep.subr.mxu0 0.0
    %787 = vmatpush1.msra.mxu0 0.0
    %788 = vmatprep.subr.mxu0 0.0
    %789 = vmatpush1.msra.mxu0 0.0
    %790 = vmatprep.subr.mxu0 0.0
    %791 = vmatpush1.msra.mxu0 0.0
    %792 = vmatprep.subr.mxu0 0.0
    %793 = vmatpush1.msra.mxu0 0.0
    %794 = vmatprep.subr.mxu0 0.0
    %795 = vmatpush1.msra.mxu0 0.0
    %796 = vmatprep.subr.mxu0 0.0
    %797 = vmatpush1.msra.mxu0 0.0
    %798 = vmatprep.subr.mxu0 0.0
    %799 = vmatpush1.msra.mxu0 0.0
    %800 = vmatprep.subr.mxu0 0.0
    %801 = vmatpush1.msra.mxu0 0.0
    %802 = vmatprep.subr.mxu0 0.0
    %803 = vmatpush1.msra.mxu0 0.0
    %804 = vmatprep.subr.mxu0 0.0
    %805 = vmatpush1.msra.mxu0 0.0
    %806 = vmatprep.subr.mxu0 0.0
    %807 = vmatpush1.msra.mxu0 0.0
    %808 = vmatprep.subr.mxu0 0.0
    %809 = vmatpush1.msra.mxu0 0.0
    %810 = vmatprep.subr.mxu0 0.0
    %811 = vmatpush1.msra.mxu0 0.0
    %812 = vmatprep.subr.mxu0 0.0
    %813 = vmatpush1.msra.mxu0 0.0
    %814 = vmatprep.mubr.f32.mxu0 0.0
    %815 = vmatmul.mubr.f32.gmra.mrb[0].mxu0 %v748
    %v816 = vpop.f32.mrb[0].mxu0
    %v817 = vadd.f32 0.0, %v816
    %v818 = vpop.f32.mrb[0].mxu0
    %v819 = vadd.f32 0.0, %v818
    %820 = vdwg.mxu0
    %v821 = vmul.f32 %v521, %v742
    %v822 = vmul.f32 %v522, %v744
    %v823 = vsub.f32 %v821, %v817
    %v824 = vsub.f32 %v822, %v819
    %825 = vrot.lane.b32.xlu0 %v823, 1
    %v826 = vpop.permute.xlu0 %825
    %827 = vrot.lane.b32.xlu0 %v824, 1
    %v828 = vpop.permute.xlu0 %827
    %v829 = vsel %vm425, %v826, %v828
    %v830 = vsel %vm425, %v828, %v826
    %v831 = vsel %vm430, 0.0, %v830
    %v832 = vsel %vm431, 0.0, %v829
    %v833 = vld [vmem:[%s3] sm:$0xff]
    %v834 = vld [vmem:[%s4] sm:$0xff]
    %836 = vset.pattern.permute.xlu0 0
    %837 = vperm.xlu0 %836, %v834
    %v838 = vpop.permute.xlu0 %837
    %vm840 = vcmask 130048
    %v842 = vsel %vm840, %v833, 0
    %844 = vmatprep.subr.mxu0 %v832
    %845 = vmatpush1.msra.mxu0 %v831
    %846 = vmatprep.subr.mxu0 %v824
    %847 = vmatpush1.msra.mxu0 %v823
    %848 = vmatprep.subr.mxu0 0.0
    %849 = vmatpush1.msra.mxu0 0.0
    %850 = vmatprep.subr.mxu0 0.0
    %851 = vmatpush1.msra.mxu0 0.0
    %852 = vmatprep.subr.mxu0 0.0
    %853 = vmatpush1.msra.mxu0 0.0
    %854 = vmatprep.subr.mxu0 0.0
    %855 = vmatpush1.msra.mxu0 0.0
    %856 = vmatprep.subr.mxu0 0.0
    %857 = vmatpush1.msra.mxu0 0.0
    %858 = vmatprep.subr.mxu0 0.0
    %859 = vmatpush1.msra.mxu0 0.0
    %860 = vmatprep.subr.mxu0 0.0
    %861 = vmatpush1.msra.mxu0 0.0
    %862 = vmatprep.subr.mxu0 0.0
    %863 = vmatpush1.msra.mxu0 0.0
    %864 = vmatprep.subr.mxu0 0.0
    %865 = vmatpush1.msra.mxu0 0.0
    %866 = vmatprep.subr.mxu0 0.0
    %867 = vmatpush1.msra.mxu0 0.0
    %868 = vmatprep.subr.mxu0 0.0
    %869 = vmatpush1.msra.mxu0 0.0
    %870 = vmatprep.subr.mxu0 0.0
    %871 = vmatpush1.msra.mxu0 0.0
    %872 = vmatprep.subr.mxu0 0.0
    %873 = vmatpush1.msra.mxu0 0.0
    %874 = vmatprep.subr.mxu0 0.0
    %875 = vmatpush1.msra.mxu0 0.0
    %876 = vmatprep.subr.mxu0 0.0
    %877 = vmatpush1.msra.mxu0 0.0
    %878 = vmatprep.subr.mxu0 0.0
    %879 = vmatpush1.msra.mxu0 0.0
    %880 = vmatprep.subr.mxu0 0.0
    %881 = vmatpush1.msra.mxu0 0.0
    %882 = vmatprep.subr.mxu0 0.0
    %883 = vmatpush1.msra.mxu0 0.0
    %884 = vmatprep.subr.mxu0 0.0
    %885 = vmatpush1.msra.mxu0 0.0
    %886 = vmatprep.subr.mxu0 0.0
    %887 = vmatpush1.msra.mxu0 0.0
    %888 = vmatprep.subr.mxu0 0.0
    %889 = vmatpush1.msra.mxu0 0.0
    %890 = vmatprep.subr.mxu0 0.0
    %891 = vmatpush1.msra.mxu0 0.0
    %892 = vmatprep.subr.mxu0 0.0
    %893 = vmatpush1.msra.mxu0 0.0
    %894 = vmatprep.subr.mxu0 0.0
    %895 = vmatpush1.msra.mxu0 0.0
    %896 = vmatprep.subr.mxu0 0.0
    %897 = vmatpush1.msra.mxu0 0.0
    %898 = vmatprep.subr.mxu0 0.0
    %899 = vmatpush1.msra.mxu0 0.0
    %900 = vmatprep.subr.mxu0 0.0
    %901 = vmatpush1.msra.mxu0 0.0
    %902 = vmatprep.subr.mxu0 0.0
    %903 = vmatpush1.msra.mxu0 0.0
    %904 = vmatprep.subr.mxu0 0.0
    %905 = vmatpush1.msra.mxu0 0.0
    %906 = vmatprep.subr.mxu0 0.0
    %907 = vmatpush1.msra.mxu0 0.0
    %908 = vmatprep.mubr.f32.mxu0 0.0
    %909 = vmatmul.mubr.f32.gmra.mrb[0].mxu0 %v842
    %v910 = vpop.f32.mrb[0].mxu0
    %v911 = vadd.f32 %v838, %v910
    %v912 = vpop.f32.mrb[0].mxu0
    %v913 = vadd.f32 %v838, %v912
    %914 = vdwg.mxu0
    %v915 = vmax.f32 %v911, 0.0
    %v916 = vmax.f32 %v913, 0.0
    %v917 = vsel %vm436, %v417, %v434
    %v918 = vsel %vm436, %v419, %v417
    %v919 = vadd.f32 %v915, %v917
    %v920 = vadd.f32 %v916, %v918
    %921 = vst [vmem:[#allocation2] sm:$0xff] %v919
    %922 = vst [vmem:[#allocation2 + $0x8] sm:$0xff] %v920
    // Predicated region
    $region30: #{cnn_block_forward.1} parent=1 // pred_check
      _
    $region31: #{cnn_block_forward.1} parent=1 // pred_check_branch
      %924 = sbr.rel (0) target = $region33
    $region32: #{cnn_block_forward.1} parent=1 // pred_region
      %s926 = ssub.s32 256, 256
      %927 = vsyncadd [#allocation3], %s926
      %s929 = sshll.u32 [#allocation2], 4
      %s930 = int_to_ptr.vmem [resolvable:$true] %s929
      %932 = dma.vmem_to_hbm [thread:$0]  %s930, 256, %s7, [#allocation3]
    $region33: #{cnn_block_forward.1} parent=1 // pred_fallthru
      _
    // Predicated region
    $region34: #{cnn_block_forward.1} parent=1 // pred_check
      _
    $region35: #{cnn_block_forward.1} parent=1 // pred_check_branch
      %934 = sbr.rel (0) target = $region37
    $region36: #{cnn_block_forward.1} parent=1 // pred_region
      %935 = dma.done [#allocation3], 256
    $region37: #{cnn_block_forward.1} parent=1 // pred_fallthru
      _
    %936 = vsyncpa [#allocation3], 1

</llo_original>
